<compile_context>
chip_gen: v5e
topology: v5e:2x2
jax: 0.10.0
libtpu: 0.0.40
codegen_flags: <defaults>
</compile_context>

<pallas_src>
import functools
import math

import jax
import jax.numpy as jnp
from jax.experimental import pallas as pl
from jax.experimental.pallas import tpu as pltpu

BN_EPS = 1e-5
OUT_LANES = 128   # lane-dense padded width for every intermediate / output
GPAD = 8          # sublane-aligned padded graph count


def sage_kernel(x_ref, adj_ref, pm_ref, cb2l_ref, w1l_ref, w1r_ref, w2l_ref,
                w2r_ref, wlin1_ref, wlin2_ref, bias_ref, out_ref, *, gpad):
    x = x_ref[...]            # [N, Cin]
    adj = adj_ref[...]        # [N, N]        mean-aggregation matrix
    pm = pm_ref[...]          # [2*Gpad, N]   rows 0..Gpad-1 = pool@adj, rows Gpad.. = pool
    p_adj = pm[:gpad]         # [Gpad, N]
    pool = pm[gpad:]          # [Gpad, N]

    bias = bias_ref[...]      # [8, 128] packed biases, zero-padded to 128 lanes
    b1l = bias[0:1, :]
    blin1 = bias[1:2, :]      # BN already folded in
    blin2 = bias[2:3, :]

    # ---- conv1: SAGEConv(in -> hidden), K-split dots (no lane concat) ----
    agg1 = jnp.dot(adj, x, preferred_element_type=jnp.float32)               # [N, Cin]
    h1 = (jnp.dot(agg1, w1l_ref[...], preferred_element_type=jnp.float32)
          + jnp.dot(x, w1r_ref[...], preferred_element_type=jnp.float32)
          + b1l)                                                             # [N, 128]

    # ---- conv2 + global_add_pool, pooling hoisted before aggregation ----
    a = jnp.dot(p_adj, h1, preferred_element_type=jnp.float32)               # [Gpad, 128]
    r = jnp.dot(pool, h1, preferred_element_type=jnp.float32)                # [Gpad, 128]
    pooled = (jnp.dot(a, w2l_ref[...], preferred_element_type=jnp.float32)
              + jnp.dot(r, w2r_ref[...], preferred_element_type=jnp.float32)
              + cb2l_ref[...])                                               # [Gpad, 128]

    # ---- lin1 (BatchNorm folded into weight/bias) + ReLU ----
    z = jnp.dot(pooled, wlin1_ref[...], preferred_element_type=jnp.float32) + blin1
    z = jnp.maximum(z, 0.0)

    # ---- lin2 into lane-dense padded output; dropout(eval) = identity ----
    out_ref[...] = (jnp.dot(z, wlin2_ref[...], preferred_element_type=jnp.float32)
                    + blin2).astype(out_ref.dtype)


def _padded_bytes(shape, itemsize=4):
    """Bytes of an array once padded to (8, 128) VMEM tiles."""
    if len(shape) == 1:
        shape = (1,) + tuple(shape)
    lead = math.prod(shape[:-2]) if len(shape) > 2 else 1
    rows = ((shape[-2] + 7) // 8) * 8
    cols = ((shape[-1] + 127) // 128) * 128
    return lead * rows * cols * itemsize


def prepare_params(params, hidden):
    """One-time preprocessing: transpose, BN fold, zero-pad hidden -> 128 lanes, pack biases."""
    cin = params["w1l"].shape[1]
    s = params["bn_g"] * jax.lax.rsqrt(params["bn_v"] + BN_EPS)

    w1l = jnp.zeros((cin, OUT_LANES), jnp.float32).at[:, :hidden].set(params["w1l"].T)
    w1r = jnp.zeros((cin, OUT_LANES), jnp.float32).at[:, :hidden].set(params["w1r"].T)
    w2l = jnp.zeros((OUT_LANES, OUT_LANES), jnp.float32).at[:hidden, :hidden].set(params["w2l"].T)
    w2r = jnp.zeros((OUT_LANES, OUT_LANES), jnp.float32).at[:hidden, :hidden].set(params["w2r"].T)

    wlin1_folded = params["wlin1"].T * s[None, :]                           # BN folded
    wlin1 = jnp.zeros((OUT_LANES, OUT_LANES), jnp.float32).at[:hidden, :hidden].set(wlin1_folded)
    blin1_folded = (params["blin1"] - params["bn_m"]) * s + params["bn_b"]
    wlin2 = jnp.zeros((OUT_LANES, OUT_LANES), jnp.float32).at[:hidden, :2].set(params["wlin2"].T)

    bias = jnp.zeros((8, OUT_LANES), jnp.float32)
    bias = bias.at[0, :hidden].set(params["b1l"])
    bias = bias.at[1, :hidden].set(blin1_folded)
    bias = bias.at[2, :2].set(params["blin2"])

    b2l_pad = jnp.zeros((OUT_LANES,), jnp.float32).at[:hidden].set(params["b2l"])
    return dict(w1l=w1l, w1r=w1r, w2l=w2l, w2r=w2r, wlin1=wlin1, wlin2=wlin2,
                bias=bias, b2l_pad=b2l_pad)


def prepare_graph(adj, pool, b2l_pad):
    """Graph-structure-only precompute: [pool@adj ; pool] stack and counts*b2l tile."""
    g, n = pool.shape
    assert g <= GPAD
    pool_pad = jnp.zeros((GPAD, n), jnp.float32).at[:g, :].set(pool)
    p_adj = pool_pad @ adj
    pm = jnp.concatenate([p_adj, pool_pad], axis=0)          # [2*Gpad, N]
    counts = jnp.sum(pool_pad, axis=-1, keepdims=True)       # [Gpad, 1]
    cb2l = counts * b2l_pad[None, :]                         # [Gpad, 128]
    return pm, cb2l


def sage_forward(x, adj, pm, cb2l, prep, num_graphs, hidden):
    """Fused Pallas kernel call. All operands fully VMEM-resident (single grid point)."""
    n, cin = x.shape
    inputs = (x, adj, pm, cb2l, prep["w1l"], prep["w1r"], prep["w2l"], prep["w2r"],
              prep["wlin1"], prep["wlin2"], prep["bias"])
    out_shape = (GPAD, OUT_LANES)

    footprint = sum(_padded_bytes(a.shape) for a in inputs) + _padded_bytes(out_shape)
    vmem_limit = max(2 * footprint, 4 << 20)
    # TODO(synk): for large N on v7x (64 MiB VMEM) switch adj to a tiled row BlockSpec
    # with a parallel grid axis instead of full VMEM residency.

    flops = 2 * (n * n * cin                          # adj @ x
                 + 2 * n * cin * OUT_LANES            # conv1 two dots
                 + 2 * GPAD * n * OUT_LANES           # pool@adj @ h1, pool @ h1
                 + 2 * GPAD * OUT_LANES * OUT_LANES   # conv2 two dots
                 + GPAD * OUT_LANES * OUT_LANES       # lin1
                 + GPAD * OUT_LANES * OUT_LANES)      # lin2 (padded)
    bytes_accessed = sum(a.size * a.dtype.itemsize for a in inputs) + \
        out_shape[0] * out_shape[1] * 4

    vmem_spec = pl.BlockSpec(memory_space=pltpu.MemorySpace.VMEM)
    out = pl.pallas_call(
        functools.partial(sage_kernel, gpad=GPAD),
        out_shape=jax.ShapeDtypeStruct(out_shape, jnp.float32),
        in_specs=[vmem_spec] * len(inputs),
        out_specs=vmem_spec,
        compiler_params=pltpu.CompilerParams(vmem_limit_bytes=int(vmem_limit)),
        cost_estimate=pl.CostEstimate(flops=int(flops), transcendentals=0,
                                      bytes_accessed=int(bytes_accessed)),
    )(*inputs)
    return out[:num_graphs, :2]


def reference_forward(x, adj, pool, params):
    """Pure-JAX reference (unfused, original ordering) for correctness checking."""
    agg1 = adj @ x
    h1 = agg1 @ params["w1l"].T + params["b1l"] + x @ params["w1r"].T
    agg2 = adj @ h1
    h2 = agg2 @ params["w2l"].T + params["b2l"] + h1 @ params["w2r"].T
    pooled = pool @ h2
    z = pooled @ params["wlin1"].T + params["blin1"]
    z = (z - params["bn_m"]) / jnp.sqrt(params["bn_v"] + BN_EPS) * params["bn_g"] + params["bn_b"]
    z = jnp.maximum(z, 0.0)
    return z @ params["wlin2"].T + params["blin2"]


def build_mean_adjacency(edge_index, num_nodes):
    """Dense A with A[dst, src] = 1/deg(dst) (PyG mean aggregation, flow src->dst)."""
    src, dst = edge_index
    a = jnp.zeros((num_nodes, num_nodes), jnp.float32).at[dst, src].add(1.0)
    deg = a.sum(axis=1, keepdims=True)
    return jnp.where(deg > 0, a / jnp.maximum(deg, 1.0), 0.0)


def build_pool_matrix(batch, num_graphs):
    n = batch.shape[0]
    return jnp.zeros((num_graphs, n), jnp.float32).at[batch, jnp.arange(n)].add(1.0)


def init_params(key, in_channels, hidden_channels, out_channels):
    ks = jax.random.split(key, 12)

    def lin_w(k, out_f, in_f):
        bound = 1.0 / jnp.sqrt(in_f)
        return jax.random.uniform(k, (out_f, in_f), jnp.float32, -bound, bound)

    def lin_b(k, out_f, in_f):
        bound = 1.0 / jnp.sqrt(in_f)
        return jax.random.uniform(k, (out_f,), jnp.float32, -bound, bound)

    return dict(
        # SAGEConv 1: lin_l (with bias) on aggregated neighbors, lin_r (no bias) on root
        w1l=lin_w(ks[0], hidden_channels, in_channels),
        b1l=lin_b(ks[1], hidden_channels, in_channels),
        w1r=lin_w(ks[2], hidden_channels, in_channels),
        # SAGEConv 2
        w2l=lin_w(ks[3], out_channels, hidden_channels),
        b2l=lin_b(ks[4], out_channels, hidden_channels),
        w2r=lin_w(ks[5], out_channels, hidden_channels),
        # lin1: hidden -> hidden
        wlin1=lin_w(ks[6], hidden_channels, hidden_channels),
        blin1=lin_b(ks[7], hidden_channels, hidden_channels),
        # bn1 (eval-mode running stats, perturbed deterministically)
        bn_g=jnp.ones((hidden_channels,), jnp.float32),
        bn_b=jnp.zeros((hidden_channels,), jnp.float32),
        bn_m=0.1 * jax.random.normal(ks[8], (hidden_channels,), jnp.float32),
        bn_v=1.0 + 0.1 * jax.random.uniform(ks[9], (hidden_channels,), jnp.float32),
        # lin2: hidden -> 2
        wlin2=lin_w(ks[10], 2, hidden_channels),
        blin2=lin_b(ks[11], 2, hidden_channels),
    )


if __name__ == "__main__":
    in_channels, hidden_channels, out_channels = 8, 32, 32  # out must equal hidden (lin1 follows conv2)
    num_nodes, num_graphs = 16, 2

    key = jax.random.PRNGKey(0)
    k_x, k_p = jax.random.split(key)

    # Node features [N, Cin]
    x = jax.random.normal(k_x, (num_nodes, in_channels), jnp.float32)

    # Bidirectional ring graph on 16 nodes (edge_index shape [2, E])
    src = jnp.arange(num_nodes, dtype=jnp.int32)
    dst = (src + 1) % num_nodes
    edge_index = jnp.stack([jnp.concatenate([src, dst]), jnp.concatenate([dst, src])])

    # batch: first 8 nodes -> graph 0, last 8 -> graph 1
    batch = jnp.concatenate([jnp.zeros(8, jnp.int32), jnp.ones(8, jnp.int32)])

    adj = build_mean_adjacency(edge_index, num_nodes)   # [N, N]
    pool = build_pool_matrix(batch, num_graphs)         # [G, N]
    params = init_params(k_p, in_channels, hidden_channels, out_channels)

    # One-time preprocessing (pre-transposed / zero-padded / BN-folded / packed).
    prep = jax.tree_util.tree_map(jax.block_until_ready,
                                  prepare_params(params, hidden_channels))
    pm, cb2l = prepare_graph(adj, pool, prep["b2l_pad"])
    pm = jax.block_until_ready(pm)
    cb2l = jax.block_until_ready(cb2l)

    out = sage_forward(x, adj, pm, cb2l, prep, num_graphs, hidden_channels)
    jax.block_until_ready(out)

    ref = reference_forward(x, adj, pool, params)
    assert out.shape == (num_graphs, 2)
    assert jnp.allclose(out, ref, atol=1e-4, rtol=1e-3), (out, ref)

    print("KERNEL_OK")
</pallas_src>

<mosaic_0001>
module attributes {stable_mosaic.version = 11 : i64} {
  func.func @sage_kernel(%arg0: memref<16x8xf32, #tpu.memory_space<vmem>>, %arg1: memref<16x16xf32, #tpu.memory_space<vmem>>, %arg2: memref<16x16xf32, #tpu.memory_space<vmem>>, %arg3: memref<8x128xf32, #tpu.memory_space<vmem>>, %arg4: memref<8x128xf32, #tpu.memory_space<vmem>>, %arg5: memref<8x128xf32, #tpu.memory_space<vmem>>, %arg6: memref<128x128xf32, #tpu.memory_space<vmem>>, %arg7: memref<128x128xf32, #tpu.memory_space<vmem>>, %arg8: memref<128x128xf32, #tpu.memory_space<vmem>>, %arg9: memref<128x128xf32, #tpu.memory_space<vmem>>, %arg10: memref<8x128xf32, #tpu.memory_space<vmem>>, %arg11: memref<8x128xf32, #tpu.memory_space<vmem>>) attributes {dimension_semantics = [], scalar_prefetch = 0 : i64, scratch_operands = 0 : i64, tpu.core_type = #tpu.core_type<tc>} {
    %c0 = arith.constant 0 : index
    %c0_0 = arith.constant 0 : index
    %0 = vector.load %arg0[%c0, %c0_0] : memref<16x8xf32, #tpu.memory_space<vmem>>, vector<16x8xf32>
    %c0_1 = arith.constant 0 : index
    %c0_2 = arith.constant 0 : index
    %1 = vector.load %arg1[%c0_1, %c0_2] : memref<16x16xf32, #tpu.memory_space<vmem>>, vector<16x16xf32>
    %c0_3 = arith.constant 0 : index
    %c0_4 = arith.constant 0 : index
    %2 = vector.load %arg2[%c0_3, %c0_4] : memref<16x16xf32, #tpu.memory_space<vmem>>, vector<16x16xf32>
    %3 = vector.extract_strided_slice %2 {offsets = [0, 0], sizes = [8, 16], strides = [1, 1]} : vector<16x16xf32> to vector<8x16xf32>
    %4 = vector.extract_strided_slice %2 {offsets = [8, 0], sizes = [8, 16], strides = [1, 1]} : vector<16x16xf32> to vector<8x16xf32>
    %c0_5 = arith.constant 0 : index
    %c0_6 = arith.constant 0 : index
    %5 = vector.load %arg10[%c0_5, %c0_6] : memref<8x128xf32, #tpu.memory_space<vmem>>, vector<8x128xf32>
    %6 = vector.extract_strided_slice %5 {offsets = [0, 0], sizes = [1, 128], strides = [1, 1]} : vector<8x128xf32> to vector<1x128xf32>
    %7 = vector.extract_strided_slice %5 {offsets = [1, 0], sizes = [1, 128], strides = [1, 1]} : vector<8x128xf32> to vector<1x128xf32>
    %8 = vector.extract_strided_slice %5 {offsets = [2, 0], sizes = [1, 128], strides = [1, 1]} : vector<8x128xf32> to vector<1x128xf32>
    %cst = arith.constant dense<0.000000e+00> : vector<16x8xf32>
    %9 = tpu.matmul %1, %0, %cst {dimension_numbers = #tpu.dot_dimension_numbers<[1], [0], [0], [1], [0, 0, 1, 1], [], []>} : vector<16x16xf32>, vector<16x8xf32>, vector<16x8xf32> -> vector<16x8xf32>
    %c0_7 = arith.constant 0 : index
    %c0_8 = arith.constant 0 : index
    %10 = vector.load %arg4[%c0_7, %c0_8] : memref<8x128xf32, #tpu.memory_space<vmem>>, vector<8x128xf32>
    %cst_9 = arith.constant dense<0.000000e+00> : vector<16x128xf32>
    %11 = tpu.matmul %9, %10, %cst_9 {dimension_numbers = #tpu.dot_dimension_numbers<[1], [0], [0], [1], [0, 0, 1, 1], [], []>} : vector<16x8xf32>, vector<8x128xf32>, vector<16x128xf32> -> vector<16x128xf32>
    %c0_10 = arith.constant 0 : index
    %c0_11 = arith.constant 0 : index
    %12 = vector.load %arg5[%c0_10, %c0_11] : memref<8x128xf32, #tpu.memory_space<vmem>>, vector<8x128xf32>
    %cst_12 = arith.constant dense<0.000000e+00> : vector<16x128xf32>
    %13 = tpu.matmul %0, %12, %cst_12 {dimension_numbers = #tpu.dot_dimension_numbers<[1], [0], [0], [1], [0, 0, 1, 1], [], []>} : vector<16x8xf32>, vector<8x128xf32>, vector<16x128xf32> -> vector<16x128xf32>
    %14 = arith.addf %11, %13 : vector<16x128xf32>
    %15 = vector.broadcast %6 : vector<1x128xf32> to vector<16x128xf32>
    %16 = arith.addf %14, %15 : vector<16x128xf32>
    %cst_13 = arith.constant dense<0.000000e+00> : vector<8x128xf32>
    %17 = tpu.matmul %3, %16, %cst_13 {dimension_numbers = #tpu.dot_dimension_numbers<[1], [0], [0], [1], [0, 0, 1, 1], [], []>} : vector<8x16xf32>, vector<16x128xf32>, vector<8x128xf32> -> vector<8x128xf32>
    %cst_14 = arith.constant dense<0.000000e+00> : vector<8x128xf32>
    %18 = tpu.matmul %4, %16, %cst_14 {dimension_numbers = #tpu.dot_dimension_numbers<[1], [0], [0], [1], [0, 0, 1, 1], [], []>} : vector<8x16xf32>, vector<16x128xf32>, vector<8x128xf32> -> vector<8x128xf32>
    %c0_15 = arith.constant 0 : index
    %c0_16 = arith.constant 0 : index
    %19 = vector.load %arg6[%c0_15, %c0_16] : memref<128x128xf32, #tpu.memory_space<vmem>>, vector<128x128xf32>
    %cst_17 = arith.constant dense<0.000000e+00> : vector<8x128xf32>
    %20 = tpu.matmul %17, %19, %cst_17 {dimension_numbers = #tpu.dot_dimension_numbers<[1], [0], [0], [1], [0, 0, 1, 1], [], []>} : vector<8x128xf32>, vector<128x128xf32>, vector<8x128xf32> -> vector<8x128xf32>
    %c0_18 = arith.constant 0 : index
    %c0_19 = arith.constant 0 : index
    %21 = vector.load %arg7[%c0_18, %c0_19] : memref<128x128xf32, #tpu.memory_space<vmem>>, vector<128x128xf32>
    %cst_20 = arith.constant dense<0.000000e+00> : vector<8x128xf32>
    %22 = tpu.matmul %18, %21, %cst_20 {dimension_numbers = #tpu.dot_dimension_numbers<[1], [0], [0], [1], [0, 0, 1, 1], [], []>} : vector<8x128xf32>, vector<128x128xf32>, vector<8x128xf32> -> vector<8x128xf32>
    %23 = arith.addf %20, %22 : vector<8x128xf32>
    %c0_21 = arith.constant 0 : index
    %c0_22 = arith.constant 0 : index
    %24 = vector.load %arg3[%c0_21, %c0_22] : memref<8x128xf32, #tpu.memory_space<vmem>>, vector<8x128xf32>
    %25 = arith.addf %23, %24 : vector<8x128xf32>
    %c0_23 = arith.constant 0 : index
    %c0_24 = arith.constant 0 : index
    %26 = vector.load %arg8[%c0_23, %c0_24] : memref<128x128xf32, #tpu.memory_space<vmem>>, vector<128x128xf32>
    %cst_25 = arith.constant dense<0.000000e+00> : vector<8x128xf32>
    %27 = tpu.matmul %25, %26, %cst_25 {dimension_numbers = #tpu.dot_dimension_numbers<[1], [0], [0], [1], [0, 0, 1, 1], [], []>} : vector<8x128xf32>, vector<128x128xf32>, vector<8x128xf32> -> vector<8x128xf32>
    %28 = vector.broadcast %7 : vector<1x128xf32> to vector<8x128xf32>
    %29 = arith.addf %27, %28 : vector<8x128xf32>
    %cst_26 = arith.constant 0.000000e+00 : f32
    %30 = vector.broadcast %cst_26 : f32 to vector<8x128xf32>
    %31 = arith.maximumf %29, %30 : vector<8x128xf32>
    %c0_27 = arith.constant 0 : index
    %c0_28 = arith.constant 0 : index
    %32 = vector.load %arg9[%c0_27, %c0_28] : memref<128x128xf32, #tpu.memory_space<vmem>>, vector<128x128xf32>
    %cst_29 = arith.constant dense<0.000000e+00> : vector<8x128xf32>
    %33 = tpu.matmul %31, %32, %cst_29 {dimension_numbers = #tpu.dot_dimension_numbers<[1], [0], [0], [1], [0, 0, 1, 1], [], []>} : vector<8x128xf32>, vector<128x128xf32>, vector<8x128xf32> -> vector<8x128xf32>
    %34 = vector.broadcast %8 : vector<1x128xf32> to vector<8x128xf32>
    %35 = arith.addf %33, %34 : vector<8x128xf32>
    %c0_30 = arith.constant 0 : index
    %c0_31 = arith.constant 0 : index
    %36 = vector.load %arg11[%c0_30, %c0_31] : memref<8x128xf32, #tpu.memory_space<vmem>>, vector<8x128xf32>
    tpu.vector_store %arg11[%c0_30, %c0_31], %35 {strides = array<i32>} : memref<8x128xf32, #tpu.memory_space<vmem>>, vector<8x128xf32>,
    return
  }
}

</mosaic_0001>

<llo_original>
// kernel: tpu_custom_call.1
$region0: #{tpu_custom_call.1}
  #allocation0 [shape = 'u32[]', space=smem, size = 0x4, offset = 0x4, fixed_abs, tag = 'smem constant byte address 0x4 - core index']
  #allocation1 [shape = 'u32[72,128]{1,0:T(1,128)}', space=vmem, size = 0x9000, scoped, tag = 'internal scratch']
  %s0 = inlined_call_operand.vmem [shape: f32[16,8], index: 0, kind: input, shape index: {}]
  %s1 = inlined_call_operand.vmem [shape: f32[16,16], index: 1, kind: input, shape index: {}]
  %s2 = inlined_call_operand.hbm [shape: f32[16,16], index: 2, kind: input, shape index: {}]
  %s3 = inlined_call_operand.vmem [shape: f32[8,128], index: 3, kind: input, shape index: {}]
  %s4 = inlined_call_operand.hbm [shape: f32[8,128], index: 4, kind: input, shape index: {}]
  %s5 = inlined_call_operand.hbm [shape: f32[8,128], index: 5, kind: input, shape index: {}]
  %s6 = inlined_call_operand.hbm [shape: f32[128,128], index: 6, kind: input, shape index: {}]
  %s7 = inlined_call_operand.hbm [shape: f32[128,128], index: 7, kind: input, shape index: {}]
  %s8 = inlined_call_operand.hbm [shape: f32[128,128], index: 8, kind: input, shape index: {}]
  %s9 = inlined_call_operand.hbm [shape: f32[128,128], index: 9, kind: input, shape index: {}]
  %s10 = inlined_call_operand.vmem [shape: f32[8,128], index: 10, kind: input, shape index: {}]
  %s11 = inlined_call_operand.hbm [shape: f32[8,128], index: 11, kind: output, shape index: {}]
  %s12 = sld [smem:[#allocation0]]
  $region82: #{tpu_custom_call.1} parent=0
    _
  %s14 = ssub.s32 1, %s12
  %s15 = scalar_select 0, %s14, %s12
  $region1: #{tpu_custom_call.1} parent=0
    #allocation2 [shape = 'u8[8192]{0}', space=vmem, size = 0x2000, scoped, tag = 'input window, operand 2, single buffered']
    #allocation3 [shape = 's32[1]{0}', space=sflag, size = 0x4, scoped, tag = 'scoped memory for tpu_custom_call.1']
    #allocation4 [shape = 's32[1]{0}', space=sflag, size = 0x4, scoped, tag = 'scoped memory for tpu_custom_call.1']
    #allocation5 [shape = 'u8[4096]{0}', space=vmem, size = 0x1000, scoped, tag = 'input window, operand 4, single buffered']
    #allocation6 [shape = 's32[1]{0}', space=sflag, size = 0x4, scoped, tag = 'scoped memory for tpu_custom_call.1']
    #allocation7 [shape = 'u8[4096]{0}', space=vmem, size = 0x1000, scoped, tag = 'input window, operand 5, single buffered']
    #allocation8 [shape = 'u8[65536]{0}', space=vmem, size = 0x10000, scoped, tag = 'input window, operand 6, single buffered']
    #allocation9 [shape = 's32[1]{0}', space=sflag, size = 0x4, scoped, tag = 'scoped memory for tpu_custom_call.1']
    #allocation10 [shape = 'u8[65536]{0}', space=vmem, size = 0x10000, scoped, tag = 'input window, operand 7, single buffered']
    #allocation11 [shape = 'u8[65536]{0}', space=vmem, size = 0x10000, scoped, tag = 'input window, operand 8, single buffered']
    #allocation12 [shape = 's32[1]{0}', space=sflag, size = 0x4, scoped, tag = 'scoped memory for tpu_custom_call.1']
    #allocation13 [shape = 'u8[65536]{0}', space=vmem, size = 0x10000, scoped, tag = 'input window, operand 9, single buffered']
    #allocation14 [shape = 'u8[4096]{0}', space=vmem, size = 0x1000, scoped, tag = 'output window, operand 0, single buffered']
    %16 = vsyncpa [#allocation3], 0
    %17 = vsyncpa [#allocation6], 0
    %18 = vsyncpa [#allocation9], 0
    %19 = vsyncpa [#allocation12], 0
    %20 = vsyncpa [#allocation4], 0
    // Predicated region
    $region2: #{tpu_custom_call.1} parent=1 // pred_check
      _
    $region3: #{tpu_custom_call.1} parent=1 // pred_check_branch
      %22 = sbr.rel (0) target = $region5
    $region4: #{tpu_custom_call.1} parent=1 // pred_region
      _
    $region5: #{tpu_custom_call.1} parent=1 // pred_fallthru
      _
    // Predicated region
    $region6: #{tpu_custom_call.1} parent=1 // pred_check
      _
    $region7: #{tpu_custom_call.1} parent=1 // pred_check_branch
      %24 = sbr.rel (0) target = $region9
    $region8: #{tpu_custom_call.1} parent=1 // pred_region
      _
    $region9: #{tpu_custom_call.1} parent=1 // pred_fallthru
      _
    // Predicated region
    $region10: #{tpu_custom_call.1} parent=1 // pred_check
      _
    $region11: #{tpu_custom_call.1} parent=1 // pred_check_branch
      %26 = sbr.rel (0) target = $region13
    $region12: #{tpu_custom_call.1} parent=1 // pred_region
      %28 = vsyncadd [#allocation3], 0
      %s29 = sshll.u32 %s2, 4
      %s30 = int_to_ptr.hbm [resolvable:$true] %s29
      %s31 = sshll.u32 [#allocation2], 4
      %s32 = int_to_ptr.vmem [resolvable:$true] %s31
      %37 = dma.hbm_to_vmem [thread:$0]  %s30, 256, %s32, [#allocation3], 128, 128, 8
    $region13: #{tpu_custom_call.1} parent=1 // pred_fallthru
      _
    // Predicated region
    $region14: #{tpu_custom_call.1} parent=1 // pred_check
      _
    $region15: #{tpu_custom_call.1} parent=1 // pred_check_branch
      %39 = sbr.rel (0) target = $region17
    $region16: #{tpu_custom_call.1} parent=1 // pred_region
      _
    $region17: #{tpu_custom_call.1} parent=1 // pred_fallthru
      _
    // Predicated region
    $region18: #{tpu_custom_call.1} parent=1 // pred_check
      _
    $region19: #{tpu_custom_call.1} parent=1 // pred_check_branch
      %41 = sbr.rel (0) target = $region21
    $region20: #{tpu_custom_call.1} parent=1 // pred_region
      %43 = vsyncadd [#allocation6], 0
      %s45 = sshll.u32 %s4, 4
      %s46 = int_to_ptr.hbm [resolvable:$true] %s45
      %s47 = sshll.u32 [#allocation5], 4
      %s48 = int_to_ptr.vmem [resolvable:$true] %s47
      %50 = dma.hbm_to_vmem [thread:$0]  %s46, 128, %s48, [#allocation6]
    $region21: #{tpu_custom_call.1} parent=1 // pred_fallthru
      _
    // Predicated region
    $region22: #{tpu_custom_call.1} parent=1 // pred_check
      _
    $region23: #{tpu_custom_call.1} parent=1 // pred_check_branch
      %52 = sbr.rel (0) target = $region25
    $region24: #{tpu_custom_call.1} parent=1 // pred_region
      %54 = vsyncadd [#allocation6], 0
      %s56 = sshll.u32 %s5, 4
      %s57 = int_to_ptr.hbm [resolvable:$true] %s56
      %s58 = sshll.u32 [#allocation7], 4
      %s59 = int_to_ptr.vmem [resolvable:$true] %s58
      %61 = dma.hbm_to_vmem [thread:$0]  %s57, 128, %s59, [#allocation6]
    $region25: #{tpu_custom_call.1} parent=1 // pred_fallthru
      _
    // Predicated region
    $region26: #{tpu_custom_call.1} parent=1 // pred_check
      _
    $region27: #{tpu_custom_call.1} parent=1 // pred_check_branch
      %63 = sbr.rel (0) target = $region29
    $region28: #{tpu_custom_call.1} parent=1 // pred_region
      %65 = vsyncadd [#allocation9], 0
      %s66 = sshll.u32 %s6, 4
      %s67 = int_to_ptr.hbm [resolvable:$true] %s66
      %s68 = sshll.u32 [#allocation8], 4
      %s69 = int_to_ptr.vmem [resolvable:$true] %s68
      %74 = dma.hbm_to_vmem [thread:$0]  %s67, 2048, %s69, [#allocation9], 128, 128, 8
    $region29: #{tpu_custom_call.1} parent=1 // pred_fallthru
      _
    // Predicated region
    $region30: #{tpu_custom_call.1} parent=1 // pred_check
      _
    $region31: #{tpu_custom_call.1} parent=1 // pred_check_branch
      %76 = sbr.rel (0) target = $region33
    $region32: #{tpu_custom_call.1} parent=1 // pred_region
      %78 = vsyncadd [#allocation9], 0
      %s79 = sshll.u32 %s7, 4
      %s80 = int_to_ptr.hbm [resolvable:$true] %s79
      %s81 = sshll.u32 [#allocation10], 4
      %s82 = int_to_ptr.vmem [resolvable:$true] %s81
      %87 = dma.hbm_to_vmem [thread:$0]  %s80, 2048, %s82, [#allocation9], 128, 128, 8
    $region33: #{tpu_custom_call.1} parent=1 // pred_fallthru
      _
    // Predicated region
    $region34: #{tpu_custom_call.1} parent=1 // pred_check
      _
    $region35: #{tpu_custom_call.1} parent=1 // pred_check_branch
      %89 = sbr.rel (0) target = $region37
    $region36: #{tpu_custom_call.1} parent=1 // pred_region
      %91 = vsyncadd [#allocation12], 0
      %s92 = sshll.u32 %s8, 4
      %s93 = int_to_ptr.hbm [resolvable:$true] %s92
      %s94 = sshll.u32 [#allocation11], 4
      %s95 = int_to_ptr.vmem [resolvable:$true] %s94
      %100 = dma.hbm_to_vmem [thread:$0]  %s93, 2048, %s95, [#allocation12], 128, 128, 8
    $region37: #{tpu_custom_call.1} parent=1 // pred_fallthru
      _
    // Predicated region
    $region38: #{tpu_custom_call.1} parent=1 // pred_check
      _
    $region39: #{tpu_custom_call.1} parent=1 // pred_check_branch
      %102 = sbr.rel (0) target = $region41
    $region40: #{tpu_custom_call.1} parent=1 // pred_region
      %104 = vsyncadd [#allocation12], 0
      %s105 = sshll.u32 %s9, 4
      %s106 = int_to_ptr.hbm [resolvable:$true] %s105
      %s107 = sshll.u32 [#allocation13], 4
      %s108 = int_to_ptr.vmem [resolvable:$true] %s107
      %113 = dma.hbm_to_vmem [thread:$0]  %s106, 2048, %s108, [#allocation12], 128, 128, 8
    $region41: #{tpu_custom_call.1} parent=1 // pred_fallthru
      _
    // Predicated region
    $region42: #{tpu_custom_call.1} parent=1 // pred_check
      _
    $region43: #{tpu_custom_call.1} parent=1 // pred_check_branch
      %115 = sbr.rel (0) target = $region45
    $region44: #{tpu_custom_call.1} parent=1 // pred_region
      _
    $region45: #{tpu_custom_call.1} parent=1 // pred_fallthru
      _
    // Predicated region
    $region46: #{tpu_custom_call.1} parent=1 // pred_check
      _
    $region47: #{tpu_custom_call.1} parent=1 // pred_check_branch
      %117 = sbr.rel (0) target = $region49
    $region48: #{tpu_custom_call.1} parent=1 // pred_region
      %119 = dma.done [#allocation3], 256
    $region49: #{tpu_custom_call.1} parent=1 // pred_fallthru
      _
    // Predicated region
    $region50: #{tpu_custom_call.1} parent=1 // pred_check
      _
    $region51: #{tpu_custom_call.1} parent=1 // pred_check_branch
      %121 = sbr.rel (0) target = $region53
    $region52: #{tpu_custom_call.1} parent=1 // pred_region
      %123 = dma.done [#allocation6], 128
    $region53: #{tpu_custom_call.1} parent=1 // pred_fallthru
      _
    // Predicated region
    $region54: #{tpu_custom_call.1} parent=1 // pred_check
      _
    $region55: #{tpu_custom_call.1} parent=1 // pred_check_branch
      %125 = sbr.rel (0) target = $region57
    $region56: #{tpu_custom_call.1} parent=1 // pred_region
      %127 = dma.done [#allocation6], 128
    $region57: #{tpu_custom_call.1} parent=1 // pred_fallthru
      _
    // Predicated region
    $region58: #{tpu_custom_call.1} parent=1 // pred_check
      _
    $region59: #{tpu_custom_call.1} parent=1 // pred_check_branch
      %129 = sbr.rel (0) target = $region61
    $region60: #{tpu_custom_call.1} parent=1 // pred_region
      %131 = dma.done [#allocation9], 2048
    $region61: #{tpu_custom_call.1} parent=1 // pred_fallthru
      _
    // Predicated region
    $region62: #{tpu_custom_call.1} parent=1 // pred_check
      _
    $region63: #{tpu_custom_call.1} parent=1 // pred_check_branch
      %133 = sbr.rel (0) target = $region65
    $region64: #{tpu_custom_call.1} parent=1 // pred_region
      %135 = dma.done [#allocation9], 2048
    $region65: #{tpu_custom_call.1} parent=1 // pred_fallthru
      _
    // Predicated region
    $region66: #{tpu_custom_call.1} parent=1 // pred_check
      _
    $region67: #{tpu_custom_call.1} parent=1 // pred_check_branch
      %137 = sbr.rel (0) target = $region69
    $region68: #{tpu_custom_call.1} parent=1 // pred_region
      %139 = dma.done [#allocation12], 2048
    $region69: #{tpu_custom_call.1} parent=1 // pred_fallthru
      _
    // Predicated region
    $region70: #{tpu_custom_call.1} parent=1 // pred_check
      _
    $region71: #{tpu_custom_call.1} parent=1 // pred_check_branch
      %141 = sbr.rel (0) target = $region73
    $region72: #{tpu_custom_call.1} parent=1 // pred_region
      %143 = dma.done [#allocation12], 2048
    $region73: #{tpu_custom_call.1} parent=1 // pred_fallthru
      _
    %v144 = vld [vmem:[%s0] sm:$0xff]
    %v145 = vld [vmem:[%s0 + $0x8] sm:$0xff]
    %v146 = vld [vmem:[%s1] sm:$0xff]
    %v147 = vld [vmem:[%s1 + $0x8] sm:$0xff]
    %v148 = vld [vmem:[#allocation2] sm:$0xff]
    %v149 = vld [vmem:[#allocation2 + $0x8] sm:$0xff]
    %v150 = vld [vmem:[%s10] sm:$0xff]
    %vm151 = vcmask 130048
    %v153 = vsel %vm151, %v146, 0
    %v156 = vsel %vm151, %v147, 0
    %158 = vmatpush.msra.mxu0 0.0
    %159 = vmatpush.msra.mxu0 0.0
    %160 = vmatpush.msra.mxu0 0.0
    %161 = vmatpush.msra.mxu0 0.0
    %162 = vmatpush.msra.mxu0 0.0
    %163 = vmatpush.msra.mxu0 0.0
    %164 = vmatpush.msra.mxu0 0.0
    %165 = vmatpush.msra.mxu0 0.0
    %166 = vmatpush.msra.mxu0 0.0
    %167 = vmatpush.msra.mxu0 0.0
    %168 = vmatpush.msra.mxu0 0.0
    %169 = vmatpush.msra.mxu0 0.0
    %170 = vmatpush.msra.mxu0 0.0
    %171 = vmatpush.msra.mxu0 0.0
    %172 = vmatpush.msra.mxu0 %v145
    %173 = vmatpush.msra.mxu0 %v144
    %174 = vmatmul.f32.gmra.mxu0 %v153
    %v175 = vpop.f32.mrf.mxu0
    %v176 = vadd.f32 0.0, %v175
    %177 = vmatmul.f32.gmra.mxu0 %v156
    %v178 = vpop.f32.mrf.mxu0
    %v179 = vadd.f32 0.0, %v178
    %180 = vdwg.mxu0
    %v181 = vld [vmem:[#allocation5] sm:$0xff]
    %v182 = vld [vmem:[#allocation7] sm:$0xff]
    %vm183 = vcmask 64512
    %v185 = vsel %vm183, %v144, 0
    %v188 = vsel %vm183, %v145, 0
    %190 = vmatpush.msra.mxu0 0.0
    %191 = vmatpush.msra.mxu0 0.0
    %192 = vmatpush.msra.mxu0 0.0
    %193 = vmatpush.msra.mxu0 0.0
    %194 = vmatpush.msra.mxu0 0.0
    %195 = vmatpush.msra.mxu0 0.0
    %196 = vmatpush.msra.mxu0 0.0
    %197 = vmatpush.msra.mxu0 0.0
    %198 = vmatpush.msra.mxu0 0.0
    %199 = vmatpush.msra.mxu0 0.0
    %200 = vmatpush.msra.mxu0 0.0
    %201 = vmatpush.msra.mxu0 0.0
    %202 = vmatpush.msra.mxu0 0.0
    %203 = vmatpush.msra.mxu0 0.0
    %204 = vmatpush.msra.mxu0 0.0
    %205 = vmatpush.msra.mxu0 %v182
    %206 = vmatmul.f32.gmra.mxu0 %v185
    %v207 = vpop.f32.mrf.mxu0
    %v208 = vadd.f32 0.0, %v207
    %209 = vmatmul.f32.gmra.mxu0 %v188
    %v210 = vpop.f32.mrf.mxu0
    %v211 = vadd.f32 0.0, %v210
    %212 = vdwg.mxu0
    %v214 = vsel %vm183, %v176, 0
    %v217 = vsel %vm183, %v179, 0
    %219 = vmatpush.msra.mxu0 0.0
    %220 = vmatpush.msra.mxu0 0.0
    %221 = vmatpush.msra.mxu0 0.0
    %222 = vmatpush.msra.mxu0 0.0
    %223 = vmatpush.msra.mxu0 0.0
    %224 = vmatpush.msra.mxu0 0.0
    %225 = vmatpush.msra.mxu0 0.0
    %226 = vmatpush.msra.mxu0 0.0
    %227 = vmatpush.msra.mxu0 0.0
    %228 = vmatpush.msra.mxu0 0.0
    %229 = vmatpush.msra.mxu0 0.0
    %230 = vmatpush.msra.mxu0 0.0
    %231 = vmatpush.msra.mxu0 0.0
    %232 = vmatpush.msra.mxu0 0.0
    %233 = vmatpush.msra.mxu0 0.0
    %234 = vmatpush.msra.mxu0 %v181
    %235 = vmatmul.f32.gmra.mxu0 %v214
    %v236 = vpop.f32.mrf.mxu0
    %v237 = vadd.f32 %v208, %v236
    %238 = vmatmul.f32.gmra.mxu0 %v217
    %v239 = vpop.f32.mrf.mxu0
    %v240 = vadd.f32 %v211, %v239
    %241 = vdwg.mxu0
    %v242 = vperm.slane %v150, 0
    %v243 = vadd.f32 %v237, %v242
    %v244 = vadd.f32 %v240, %v242
    %v246 = vsel %vm151, %v148, 0
    %248 = vmatpush.msra.mxu0 0.0
    %249 = vmatpush.msra.mxu0 0.0
    %250 = vmatpush.msra.mxu0 0.0
    %251 = vmatpush.msra.mxu0 0.0
    %252 = vmatpush.msra.mxu0 0.0
    %253 = vmatpush.msra.mxu0 0.0
    %254 = vmatpush.msra.mxu0 0.0
    %255 = vmatpush.msra.mxu0 0.0
    %256 = vmatpush.msra.mxu0 0.0
    %257 = vmatpush.msra.mxu0 0.0
    %258 = vmatpush.msra.mxu0 0.0
    %259 = vmatpush.msra.mxu0 0.0
    %260 = vmatpush.msra.mxu0 0.0
    %261 = vmatpush.msra.mxu0 0.0
    %262 = vmatpush.msra.mxu0 %v244
    %263 = vmatpush.msra.mxu0 %v243
    %264 = vmatmul.f32.gmra.mxu0 %v246
    %v265 = vpop.f32.mrf.mxu0
    %v266 = vadd.f32 0.0, %v265
    %267 = vdwg.mxu0
    %v269 = vsel %vm151, %v149, 0
    %271 = vmatpush.msra.mxu0 0.0
    %272 = vmatpush.msra.mxu0 0.0
    %273 = vmatpush.msra.mxu0 0.0
    %274 = vmatpush.msra.mxu0 0.0
    %275 = vmatpush.msra.mxu0 0.0
    %276 = vmatpush.msra.mxu0 0.0
    %277 = vmatpush.msra.mxu0 0.0
    %278 = vmatpush.msra.mxu0 0.0
    %279 = vmatpush.msra.mxu0 0.0
    %280 = vmatpush.msra.mxu0 0.0
    %281 = vmatpush.msra.mxu0 0.0
    %282 = vmatpush.msra.mxu0 0.0
    %283 = vmatpush.msra.mxu0 0.0
    %284 = vmatpush.msra.mxu0 0.0
    %285 = vmatpush.msra.mxu0 %v244
    %286 = vmatpush.msra.mxu0 %v243
    %287 = vmatmul.f32.gmra.mxu0 %v269
    %v288 = vpop.f32.mrf.mxu0
    %v289 = vadd.f32 0.0, %v288
    %290 = vdwg.mxu0
    %v291 = vld [vmem:[#allocation8] sm:$0xff]
    %v292 = vld [vmem:[#allocation8 + $0x8] sm:$0xff]
    %v293 = vld [vmem:[#allocation8 + $0x10] sm:$0xff]
    %v294 = vld [vmem:[#allocation8 + $0x18] sm:$0xff]
    %v295 = vld [vmem:[#allocation8 + $0x20] sm:$0xff]
    %v296 = vld [vmem:[#allocation8 + $0x28] sm:$0xff]
    %v297 = vld [vmem:[#allocation8 + $0x30] sm:$0xff]
    %v298 = vld [vmem:[#allocation8 + $0x38] sm:$0xff]
    %v299 = vld [vmem:[#allocation8 + $0x40] sm:$0xff]
    %v300 = vld [vmem:[#allocation8 + $0x48] sm:$0xff]
    %v301 = vld [vmem:[#allocation8 + $0x50] sm:$0xff]
    %v302 = vld [vmem:[#allocation8 + $0x58] sm:$0xff]
    %v303 = vld [vmem:[#allocation8 + $0x60] sm:$0xff]
    %v304 = vld [vmem:[#allocation8 + $0x68] sm:$0xff]
    %v305 = vld [vmem:[#allocation8 + $0x70] sm:$0xff]
    %v306 = vld [vmem:[#allocation8 + $0x78] sm:$0xff]
    %v307 = vld [vmem:[#allocation10] sm:$0xff]
    %v308 = vld [vmem:[#allocation10 + $0x8] sm:$0xff]
    %v309 = vld [vmem:[#allocation10 + $0x10] sm:$0xff]
    %v310 = vld [vmem:[#allocation10 + $0x18] sm:$0xff]
    %v311 = vld [vmem:[#allocation10 + $0x20] sm:$0xff]
    %v312 = vld [vmem:[#allocation10 + $0x28] sm:$0xff]
    %v313 = vld [vmem:[#allocation10 + $0x30] sm:$0xff]
    %v314 = vld [vmem:[#allocation10 + $0x38] sm:$0xff]
    %v315 = vld [vmem:[#allocation10 + $0x40] sm:$0xff]
    %v316 = vld [vmem:[#allocation10 + $0x48] sm:$0xff]
    %v317 = vld [vmem:[#allocation10 + $0x50] sm:$0xff]
    %v318 = vld [vmem:[#allocation10 + $0x58] sm:$0xff]
    %v319 = vld [vmem:[#allocation10 + $0x60] sm:$0xff]
    %v320 = vld [vmem:[#allocation10 + $0x68] sm:$0xff]
    %v321 = vld [vmem:[#allocation10 + $0x70] sm:$0xff]
    %v322 = vld [vmem:[#allocation10 + $0x78] sm:$0xff]
    %323 = vmatpush.msra.mxu0 %v322
    %324 = vmatpush.msra.mxu0 %v321
    %325 = vmatpush.msra.mxu0 %v320
    %326 = vmatpush.msra.mxu0 %v319
    %327 = vmatpush.msra.mxu0 %v318
    %328 = vmatpush.msra.mxu0 %v317
    %329 = vmatpush.msra.mxu0 %v316
    %330 = vmatpush.msra.mxu0 %v315
    %331 = vmatpush.msra.mxu0 %v314
    %332 = vmatpush.msra.mxu0 %v313
    %333 = vmatpush.msra.mxu0 %v312
    %334 = vmatpush.msra.mxu0 %v311
    %335 = vmatpush.msra.mxu0 %v310
    %336 = vmatpush.msra.mxu0 %v309
    %337 = vmatpush.msra.mxu0 %v308
    %338 = vmatpush.msra.mxu0 %v307
    %339 = vmatmul.f32.gmra.mxu0 %v289
    %v340 = vpop.f32.mrf.mxu0
    %v341 = vadd.f32 0.0, %v340
    %342 = vdwg.mxu0
    %343 = vmatpush.msra.mxu0 %v306
    %344 = vmatpush.msra.mxu0 %v305
    %345 = vmatpush.msra.mxu0 %v304
    %346 = vmatpush.msra.mxu0 %v303
    %347 = vmatpush.msra.mxu0 %v302
    %348 = vmatpush.msra.mxu0 %v301
    %349 = vmatpush.msra.mxu0 %v300
    %350 = vmatpush.msra.mxu0 %v299
    %351 = vmatpush.msra.mxu0 %v298
    %352 = vmatpush.msra.mxu0 %v297
    %353 = vmatpush.msra.mxu0 %v296
    %354 = vmatpush.msra.mxu0 %v295
    %355 = vmatpush.msra.mxu0 %v294
    %356 = vmatpush.msra.mxu0 %v293
    %357 = vmatpush.msra.mxu0 %v292
    %358 = vmatpush.msra.mxu0 %v291
    %359 = vmatmul.f32.gmra.mxu0 %v266
    %v360 = vpop.f32.mrf.mxu0
    %v361 = vadd.f32 %v341, %v360
    %362 = vdwg.mxu0
    %v363 = vld [vmem:[%s3] sm:$0xff]
    %v364 = vadd.f32 %v361, %v363
    %v365 = vld [vmem:[#allocation11] sm:$0xff]
    %v366 = vld [vmem:[#allocation11 + $0x8] sm:$0xff]
    %v367 = vld [vmem:[#allocation11 + $0x10] sm:$0xff]
    %v368 = vld [vmem:[#allocation11 + $0x18] sm:$0xff]
    %v369 = vld [vmem:[#allocation11 + $0x20] sm:$0xff]
    %v370 = vld [vmem:[#allocation11 + $0x28] sm:$0xff]
    %v371 = vld [vmem:[#allocation11 + $0x30] sm:$0xff]
    %v372 = vld [vmem:[#allocation11 + $0x38] sm:$0xff]
    %v373 = vld [vmem:[#allocation11 + $0x40] sm:$0xff]
    %v374 = vld [vmem:[#allocation11 + $0x48] sm:$0xff]
    %v375 = vld [vmem:[#allocation11 + $0x50] sm:$0xff]
    %v376 = vld [vmem:[#allocation11 + $0x58] sm:$0xff]
    %v377 = vld [vmem:[#allocation11 + $0x60] sm:$0xff]
    %v378 = vld [vmem:[#allocation11 + $0x68] sm:$0xff]
    %v379 = vld [vmem:[#allocation11 + $0x70] sm:$0xff]
    %v380 = vld [vmem:[#allocation11 + $0x78] sm:$0xff]
    %v381 = vperm.slane %v150, 1
    %382 = vmatpush.msra.mxu0 %v380
    %383 = vmatpush.msra.mxu0 %v379
    %384 = vmatpush.msra.mxu0 %v378
    %385 = vmatpush.msra.mxu0 %v377
    %386 = vmatpush.msra.mxu0 %v376
    %387 = vmatpush.msra.mxu0 %v375
    %388 = vmatpush.msra.mxu0 %v374
    %389 = vmatpush.msra.mxu0 %v373
    %390 = vmatpush.msra.mxu0 %v372
    %391 = vmatpush.msra.mxu0 %v371
    %392 = vmatpush.msra.mxu0 %v370
    %393 = vmatpush.msra.mxu0 %v369
    %394 = vmatpush.msra.mxu0 %v368
    %395 = vmatpush.msra.mxu0 %v367
    %396 = vmatpush.msra.mxu0 %v366
    %397 = vmatpush.msra.mxu0 %v365
    %398 = vmatmul.f32.gmra.mxu0 %v364
    %v399 = vpop.f32.mrf.mxu0
    %v400 = vadd.f32 %v381, %v399
    %401 = vdwg.mxu0
    %v402 = vmax.f32 %v400, 0.0
    %v403 = vld [vmem:[#allocation13] sm:$0xff]
    %v404 = vld [vmem:[#allocation13 + $0x8] sm:$0xff]
    %v405 = vld [vmem:[#allocation13 + $0x10] sm:$0xff]
    %v406 = vld [vmem:[#allocation13 + $0x18] sm:$0xff]
    %v407 = vld [vmem:[#allocation13 + $0x20] sm:$0xff]
    %v408 = vld [vmem:[#allocation13 + $0x28] sm:$0xff]
    %v409 = vld [vmem:[#allocation13 + $0x30] sm:$0xff]
    %v410 = vld [vmem:[#allocation13 + $0x38] sm:$0xff]
    %v411 = vld [vmem:[#allocation13 + $0x40] sm:$0xff]
    %v412 = vld [vmem:[#allocation13 + $0x48] sm:$0xff]
    %v413 = vld [vmem:[#allocation13 + $0x50] sm:$0xff]
    %v414 = vld [vmem:[#allocation13 + $0x58] sm:$0xff]
    %v415 = vld [vmem:[#allocation13 + $0x60] sm:$0xff]
    %v416 = vld [vmem:[#allocation13 + $0x68] sm:$0xff]
    %v417 = vld [vmem:[#allocation13 + $0x70] sm:$0xff]
    %v418 = vld [vmem:[#allocation13 + $0x78] sm:$0xff]
    %v419 = vperm.slane %v150, 2
    %420 = vmatpush.msra.mxu0 %v418
    %421 = vmatpush.msra.mxu0 %v417
    %422 = vmatpush.msra.mxu0 %v416
    %423 = vmatpush.msra.mxu0 %v415
    %424 = vmatpush.msra.mxu0 %v414
    %425 = vmatpush.msra.mxu0 %v413
    %426 = vmatpush.msra.mxu0 %v412
    %427 = vmatpush.msra.mxu0 %v411
    %428 = vmatpush.msra.mxu0 %v410
    %429 = vmatpush.msra.mxu0 %v409
    %430 = vmatpush.msra.mxu0 %v408
    %431 = vmatpush.msra.mxu0 %v407
    %432 = vmatpush.msra.mxu0 %v406
    %433 = vmatpush.msra.mxu0 %v405
    %434 = vmatpush.msra.mxu0 %v404
    %435 = vmatpush.msra.mxu0 %v403
    %436 = vmatmul.f32.gmra.mxu0 %v402
    %v437 = vpop.f32.mrf.mxu0
    %v438 = vadd.f32 %v419, %v437
    %439 = vdwg.mxu0
    %440 = vst [vmem:[#allocation14] sm:$0xff] %v438
    // Predicated region
    $region74: #{tpu_custom_call.1} parent=1 // pred_check
      _
    $region75: #{tpu_custom_call.1} parent=1 // pred_check_branch
      %442 = sbr.rel (0) target = $region77
    $region76: #{tpu_custom_call.1} parent=1 // pred_region
      %444 = vsyncadd [#allocation4], 0
      %s446 = sshll.u32 [#allocation14], 4
      %s447 = int_to_ptr.vmem [resolvable:$true] %s446
      %s448 = sshll.u32 %s11, 4
      %s449 = int_to_ptr.hbm [resolvable:$true] %s448
      %451 = dma.vmem_to_hbm [thread:$0]  %s447, 128, %s449, [#allocation4]
    $region77: #{tpu_custom_call.1} parent=1 // pred_fallthru
      _
    // Predicated region
    $region78: #{tpu_custom_call.1} parent=1 // pred_check
      _
    $region79: #{tpu_custom_call.1} parent=1 // pred_check_branch
      %453 = sbr.rel (0) target = $region81
    $region80: #{tpu_custom_call.1} parent=1 // pred_region
      %455 = dma.done [#allocation4], 128
    $region81: #{tpu_custom_call.1} parent=1 // pred_fallthru
      _
    %456 = vsyncpa [#allocation3], 1
    %457 = vsyncpa [#allocation6], 1
    %458 = vsyncpa [#allocation9], 1
    %459 = vsyncpa [#allocation12], 1
    %460 = vsyncpa [#allocation4], 1

</llo_original>
